<compile_context>
chip_gen: v7x
topology: tpu7x:2x2x1
jax: 0.10.0
libtpu: 0.0.40
codegen_flags: <defaults>
</compile_context>

<pallas_src>
import jax
import jax.numpy as jnp
from jax.experimental import pallas as pl
from jax.experimental.pallas import tpu as pltpu


def _hybrid_mf_kernel(wcf_ref, uh_ref, ih_ref, bias_ref, out_ref):
    # wcf_ref  : SMEM f32[1]  = [w_cf]
    # uh_ref   : (F, tb)   ih_ref : (F, tb)   bias_ref/out_ref : (1, tb)
    cf = jnp.sum(uh_ref[...] * ih_ref[...], axis=0, keepdims=True)   # (1, tb)
    out_ref[...] = wcf_ref[0] * cf + bias_ref[...]


def hybrid_mf_forward(user_idx, item_idx, params, *, block_b=8192):
    """Pallas implementation of HybridMatrixFactorization.forward -> (B,)."""
    B = int(user_idx.shape[0])
    F = params["user_factors"].shape[1]

    # ---- batch tile: multiple of 128 (lane width), >=2 grid steps if B allows,
    #      never larger than the padded batch.  With the 2F+1 f32/sample layout
    #      even block_b=32768 fits v5e's 16 MiB default scoped VMEM. ----
    block_b = max(128, (int(block_b) // 128) * 128)
    block_b = min(block_b, 32768)
    block_b = min(block_b, 128 * pl.cdiv(B, 256))   # keep >=2 steps (v7x megacore)
    block_b = max(block_b, 128)
    block_b = min(block_b, 128 * pl.cdiv(B, 128))   # don't exceed padded batch
    B_pad = block_b * pl.cdiv(B, block_b)

    # ---- fold scalar constants / precompute per-item content score ----
    w_cf = params["w_cf"].reshape(()).astype(jnp.float32)
    w_cb = params["w_cb"].reshape(()).astype(jnp.float32)
    c0 = (w_cb * params["content_b"].reshape(())
          + params["global_bias"].reshape(())).astype(jnp.float32)
    # One (n_items,) matvec, computed once per call, independent of batch size.
    content_score = w_cb * (params["movie_embeddings"].astype(jnp.float32)
                            @ params["content_w"].astype(jnp.float32))

    # ---- glue: pad indices, gather rows, transpose to lane-dense layout ----
    uidx = jnp.pad(user_idx, (0, B_pad - B))
    iidx = jnp.pad(item_idx, (0, B_pad - B))
    uh_t = jnp.take(params["user_factors"], uidx, axis=0).T          # (F, Bp)
    ih_t = jnp.take(params["item_factors"], iidx, axis=0).T          # (F, Bp)
    bias_sum = (jnp.take(params["user_bias"][:, 0], uidx, axis=0)
                + jnp.take(params["item_bias"][:, 0], iidx, axis=0)
                + jnp.take(content_score, iidx, axis=0)
                + c0).reshape(1, B_pad).astype(jnp.float32)          # (1, Bp)

    scalars = w_cf.reshape(1)                                         # (1,)

    grid = (B_pad // block_b,)
    out = pl.pallas_call(
        _hybrid_mf_kernel,
        out_shape=jax.ShapeDtypeStruct((1, B_pad), jnp.float32),
        grid_spec=pltpu.PrefetchScalarGridSpec(
            num_scalar_prefetch=0,
            grid=grid,
            in_specs=[
                pl.BlockSpec(memory_space=pltpu.MemorySpace.SMEM),     # w_cf
                pl.BlockSpec((F, block_b), lambda i: (0, i)),          # user_h.T
                pl.BlockSpec((F, block_b), lambda i: (0, i)),          # item_h.T
                pl.BlockSpec((1, block_b), lambda i: (0, i)),          # folded biases
            ],
            out_specs=pl.BlockSpec((1, block_b), lambda i: (0, i)),
        ),
        compiler_params=pltpu.CompilerParams(
            dimension_semantics=("parallel",)),
    )(scalars, uh_t, ih_t, bias_sum)
    return out[0, :B]                                                  # (B,)


def _reference_forward(user_idx, item_idx, params):
    """Pure-JAX reference mirroring the PyTorch module."""
    user_h = params["user_factors"][user_idx]
    item_h = params["item_factors"][item_idx]
    cf_pred = jnp.sum(user_h * item_h, axis=1)
    cb_pred = (params["movie_embeddings"][item_idx] @ params["content_w"]
               + params["content_b"]).reshape(-1)
    pred = params["w_cf"] * cf_pred + params["w_cb"] * cb_pred
    pred = pred + params["item_bias"][item_idx, 0] + params["user_bias"][user_idx, 0] \
           + params["global_bias"][0]
    return pred


def init_params(key, n_users, n_items, n_factors, embedding_dim):
    ks = jax.random.split(key, 6)
    return {
        "user_factors": jax.random.normal(ks[0], (n_users, n_factors), jnp.float32),
        "item_factors": jax.random.normal(ks[1], (n_items, n_factors), jnp.float32),
        "user_bias": jax.random.normal(ks[2], (n_users, 1), jnp.float32) * 0.01,
        "item_bias": jax.random.normal(ks[3], (n_items, 1), jnp.float32) * 0.01,
        "global_bias": jnp.zeros((1,), jnp.float32),
        "movie_embeddings": jax.random.normal(ks[4], (n_items, embedding_dim),
                                              jnp.float32),
        "w_cf": jnp.array(0.5, jnp.float32),
        "w_cb": jnp.array(0.5, jnp.float32),
        # nn.Linear(embedding_dim, 1): weight stored as (E,), bias ()
        "content_w": jax.random.normal(ks[5], (embedding_dim,), jnp.float32)
                     * (1.0 / jnp.sqrt(embedding_dim)),
        "content_b": jnp.zeros((), jnp.float32),
    }


if __name__ == "__main__":
    n_users, n_items = 32, 48
    n_factors, embedding_dim = 16, 32
    batch = 8

    key = jax.random.PRNGKey(0)
    kp, ku, ki = jax.random.split(key, 3)
    params = init_params(kp, n_users, n_items, n_factors, embedding_dim)
    user_idx = jax.random.randint(ku, (batch,), 0, n_users, dtype=jnp.int32)
    item_idx = jax.random.randint(ki, (batch,), 0, n_items, dtype=jnp.int32)

    out = hybrid_mf_forward(user_idx, item_idx, params)
    out = jax.block_until_ready(out)

    ref = _reference_forward(user_idx, item_idx, params)
    assert out.shape == (batch,)
    assert jnp.allclose(out, ref, atol=1e-5, rtol=1e-5), (out, ref)
    print("KERNEL_OK")
</pallas_src>

<mosaic_0001>
module attributes {stable_mosaic.version = 11 : i64} {
  func.func @_hybrid_mf_kernel(%arg0: i32, %arg1: memref<1xf32, #tpu.memory_space<smem>>, %arg2: memref<16x128xf32, #tpu.memory_space<vmem>>, %arg3: memref<16x128xf32, #tpu.memory_space<vmem>>, %arg4: memref<1x128xf32, #tpu.memory_space<vmem>>, %arg5: memref<1x128xf32, #tpu.memory_space<vmem>>) attributes {dimension_semantics = [#tpu.dimension_semantics<parallel>], iteration_bounds = array<i64: 1>, scalar_prefetch = 0 : i64, scratch_operands = 0 : i64, tpu.core_type = #tpu.core_type<tc>, window_params = [{transform_indices = @transform_0, window_bounds = array<i64: 1>}, {transform_indices = @transform_1, window_bounds = array<i64: 16, 128>}, {transform_indices = @transform_2, window_bounds = array<i64: 16, 128>}, {transform_indices = @transform_3, window_bounds = array<i64: 1, 128>}, {transform_indices = @transform_4, window_bounds = array<i64: 1, 128>}]} {
    %c0 = arith.constant 0 : index
    %c0_0 = arith.constant 0 : index
    %0 = vector.load %arg2[%c0, %c0_0] : memref<16x128xf32, #tpu.memory_space<vmem>>, vector<16x128xf32>
    %c0_1 = arith.constant 0 : index
    %c0_2 = arith.constant 0 : index
    %1 = vector.load %arg3[%c0_1, %c0_2] : memref<16x128xf32, #tpu.memory_space<vmem>>, vector<16x128xf32>
    %2 = arith.mulf %0, %1 : vector<16x128xf32>
    %cst = arith.constant dense<0.000000e+00> : vector<128xf32>
    %3 = vector.multi_reduction <add>, %2, %cst [0] : vector<16x128xf32> to vector<128xf32>
    %4 = vector.shape_cast %3 : vector<128xf32> to vector<1x128xf32>
    %c0_3 = arith.constant 0 : index
    %5 = memref.load %arg1[%c0_3] : memref<1xf32, #tpu.memory_space<smem>>
    %6 = vector.broadcast %5 : f32 to vector<1x128xf32>
    %7 = arith.mulf %6, %4 : vector<1x128xf32>
    %c0_4 = arith.constant 0 : index
    %c0_5 = arith.constant 0 : index
    %8 = vector.load %arg4[%c0_4, %c0_5] : memref<1x128xf32, #tpu.memory_space<vmem>>, vector<1x128xf32>
    %9 = arith.addf %7, %8 : vector<1x128xf32>
    %c0_6 = arith.constant 0 : index
    %c0_7 = arith.constant 0 : index
    %10 = vector.load %arg5[%c0_6, %c0_7] : memref<1x128xf32, #tpu.memory_space<vmem>>, vector<1x128xf32>
    tpu.vector_store %arg5[%c0_6, %c0_7], %9 {strides = array<i32>} : memref<1x128xf32, #tpu.memory_space<vmem>>, vector<1x128xf32>,
    return
  }
  func.func @transform_0(%arg0: i32) -> i32 {
    %c0_i32 = arith.constant 0 : i32
    %c0_i32_0 = arith.constant 0 : i32
    return %c0_i32 : i32
  }
  func.func @transform_1(%arg0: i32) -> (i32, i32) {
    %c0_i32 = arith.constant 0 : i32
    %c0_i32_0 = arith.constant 0 : i32
    return %c0_i32, %arg0 : i32, i32
  }
  func.func @transform_2(%arg0: i32) -> (i32, i32) {
    %c0_i32 = arith.constant 0 : i32
    %c0_i32_0 = arith.constant 0 : i32
    return %c0_i32, %arg0 : i32, i32
  }
  func.func @transform_3(%arg0: i32) -> (i32, i32) {
    %c0_i32 = arith.constant 0 : i32
    %c0_i32_0 = arith.constant 0 : i32
    return %c0_i32, %arg0 : i32, i32
  }
  func.func @transform_4(%arg0: i32) -> (i32, i32) {
    %c0_i32 = arith.constant 0 : i32
    %c0_i32_0 = arith.constant 0 : i32
    return %c0_i32, %arg0 : i32, i32
  }
}

</mosaic_0001>

<llo_original>
// kernel: tpu_custom_call.1
$region0: #{tpu_custom_call.1}
  #allocation0 [shape = 'u32[]', space=smem, size = 0x4, offset = 0x4, fixed_abs, tag = 'smem constant byte address 0x4 - core index']
  #allocation1 [shape = 'u32[144,128]{1,0:T(1,128)}', space=vmem, size = 0x12000, scoped, tag = 'internal scratch']
  #allocation2 [shape = 'f32[1]{0:T(128)S(6)}', space=smem, size = 0x200, scoped, tag = 'scoped memory for tpu_custom_call.1']
  %s0 = inlined_call_operand.<no memory space> [shape: f32[1], index: 0, kind: input, shape index: {}]
  %s1 = inlined_call_operand.hbm [shape: f32[16,128], index: 1, kind: input, shape index: {}]
  %s2 = inlined_call_operand.hbm [shape: f32[16,128], index: 2, kind: input, shape index: {}]
  %s3 = inlined_call_operand.vmem [shape: f32[1,128], index: 3, kind: input, shape index: {}]
  %s4 = inlined_call_operand.hbm [shape: f32[1,128], index: 4, kind: output, shape index: {}]
  %s5 = sld [smem:[#allocation0]]
  $region34: #{tpu_custom_call.1} parent=0
    _
  %s7 = ssub.s32 1, %s5
  %s8 = scalar_select 0, %s7, %s5
  %9 = sst [smem:[#allocation2]] %s0
  $region1: #{tpu_custom_call.1} parent=0
    #allocation3 [shape = 'u8[8192]{0}', space=vmem, size = 0x2000, scoped, tag = 'input window, operand 1, single buffered']
    #allocation4 [shape = 's32[1]{0}', space=sflag, size = 0x4, scoped, tag = 'scoped memory for tpu_custom_call.1']
    #allocation5 [shape = 's32[1]{0}', space=sflag, size = 0x4, scoped, tag = 'scoped memory for tpu_custom_call.1']
    #allocation6 [shape = 'u8[8192]{0}', space=vmem, size = 0x2000, scoped, tag = 'input window, operand 2, single buffered']
    #allocation7 [shape = 's32[1]{0}', space=sflag, size = 0x4, scoped, tag = 'scoped memory for tpu_custom_call.1']
    #allocation8 [shape = 'u8[512]{0}', space=vmem, size = 0x400, scoped, tag = 'output window, operand 0, single buffered']
    %10 = vsyncpa [#allocation4], 0
    %11 = vsyncpa [#allocation7], 0
    %12 = vsyncpa [#allocation5], 0
    // Predicated region
    $region2: #{tpu_custom_call.1} parent=1 // pred_check
      _
    $region3: #{tpu_custom_call.1} parent=1 // pred_check_branch
      %14 = sbr.rel (0) target = $region5
    $region4: #{tpu_custom_call.1} parent=1 // pred_region
      _
    $region5: #{tpu_custom_call.1} parent=1 // pred_fallthru
      _
    // Predicated region
    $region6: #{tpu_custom_call.1} parent=1 // pred_check
      _
    $region7: #{tpu_custom_call.1} parent=1 // pred_check_branch
      %16 = sbr.rel (0) target = $region9
    $region8: #{tpu_custom_call.1} parent=1 // pred_region
      %s18 = ssub.s32 256, 256
      %19 = vsyncadd [#allocation4], %s18
      %s20 = sshll.u32 [#allocation3], 4
      %s21 = int_to_ptr.vmem [resolvable:$true] %s20
      %26 = dma.hbm_to_vmem [thread:$0]  %s1, 256, %s21, [#allocation4], 128, 128, 8
    $region9: #{tpu_custom_call.1} parent=1 // pred_fallthru
      _
    // Predicated region
    $region10: #{tpu_custom_call.1} parent=1 // pred_check
      _
    $region11: #{tpu_custom_call.1} parent=1 // pred_check_branch
      %28 = sbr.rel (0) target = $region13
    $region12: #{tpu_custom_call.1} parent=1 // pred_region
      %s30 = ssub.s32 256, 256
      %31 = vsyncadd [#allocation7], %s30
      %s32 = sshll.u32 [#allocation6], 4
      %s33 = int_to_ptr.vmem [resolvable:$true] %s32
      %38 = dma.hbm_to_vmem [thread:$0]  %s2, 256, %s33, [#allocation7], 128, 128, 8
    $region13: #{tpu_custom_call.1} parent=1 // pred_fallthru
      _
    // Predicated region
    $region14: #{tpu_custom_call.1} parent=1 // pred_check
      _
    $region15: #{tpu_custom_call.1} parent=1 // pred_check_branch
      %40 = sbr.rel (0) target = $region17
    $region16: #{tpu_custom_call.1} parent=1 // pred_region
      _
    $region17: #{tpu_custom_call.1} parent=1 // pred_fallthru
      _
    // Predicated region
    $region18: #{tpu_custom_call.1} parent=1 // pred_check
      _
    $region19: #{tpu_custom_call.1} parent=1 // pred_check_branch
      %42 = sbr.rel (0) target = $region21
    $region20: #{tpu_custom_call.1} parent=1 // pred_region
      %43 = dma.done [#allocation4], 256
    $region21: #{tpu_custom_call.1} parent=1 // pred_fallthru
      _
    // Predicated region
    $region22: #{tpu_custom_call.1} parent=1 // pred_check
      _
    $region23: #{tpu_custom_call.1} parent=1 // pred_check_branch
      %45 = sbr.rel (0) target = $region25
    $region24: #{tpu_custom_call.1} parent=1 // pred_region
      %46 = dma.done [#allocation7], 256
    $region25: #{tpu_custom_call.1} parent=1 // pred_fallthru
      _
    %v47 = vld [vmem:[#allocation3] sm:$0xff]
    %v48 = vld [vmem:[#allocation3 + $0x8] sm:$0xff]
    %v49 = vld [vmem:[#allocation6] sm:$0xff]
    %v50 = vld [vmem:[#allocation6 + $0x8] sm:$0xff]
    %v51 = vmul.f32 %v47, %v49
    %v52 = vmul.f32 %v48, %v50
    %v53 = vadd.f32 %v51, %v52
    %v54 = vrot.slane %v53, 4
    %v55 = vadd.f32 %v53, %v54
    %v56 = vrot.slane %v55, 2
    %v57 = vadd.f32 %v55, %v56
    %v58 = vrot.slane %v57, 1
    %v59 = vadd.f32 %v57, %v58
    %s60 = sld [smem:[#allocation2]]
    %v61 = vstv %s60
    %v62 = vmul.f32 %v61, %v59
    %v63 = vld [vmem:[%s3] sm:$0x1]
    %v64 = vadd.f32 %v62, %v63
    %65 = vst [vmem:[#allocation8] sm:$0x1] %v64
    // Predicated region
    $region26: #{tpu_custom_call.1} parent=1 // pred_check
      _
    $region27: #{tpu_custom_call.1} parent=1 // pred_check_branch
      %67 = sbr.rel (0) target = $region29
    $region28: #{tpu_custom_call.1} parent=1 // pred_region
      %s69 = ssub.s32 16, 16
      %70 = vsyncadd [#allocation5], %s69
      %s72 = sshll.u32 [#allocation8], 4
      %s73 = int_to_ptr.vmem [resolvable:$true] %s72
      %75 = dma.vmem_to_hbm [thread:$0]  %s73, 16, %s4, [#allocation5]
    $region29: #{tpu_custom_call.1} parent=1 // pred_fallthru
      _
    // Predicated region
    $region30: #{tpu_custom_call.1} parent=1 // pred_check
      _
    $region31: #{tpu_custom_call.1} parent=1 // pred_check_branch
      %77 = sbr.rel (0) target = $region33
    $region32: #{tpu_custom_call.1} parent=1 // pred_region
      %78 = dma.done [#allocation5], 16
    $region33: #{tpu_custom_call.1} parent=1 // pred_fallthru
      _
    %79 = vsyncpa [#allocation4], 1
    %80 = vsyncpa [#allocation7], 1
    %81 = vsyncpa [#allocation5], 1

</llo_original>
